<compile_context>
chip_gen: v6e
topology: v6e:2x2x1
jax: 0.10.0
libtpu: 0.0.40
codegen_flags: <defaults>
</compile_context>

<pallas_src>
import functools

import jax
import jax.numpy as jnp
from jax.experimental import pallas as pl
from jax.experimental.pallas import tpu as pltpu


def _round_up(x, m):
    return (x + m - 1) // m * m


def _silu(h):
    # SiLU = h * sigmoid(h); exp and the approx reciprocal both run on the EUP,
    # keeping the 4 VALU slots free for the adds/muls.
    return h * pl.reciprocal(1.0 + jnp.exp(-h), approx=True)


def mlp_kernel(x_ref, w1_ref, b1_ref, w2_ref, b2_ref, w3_ref, b3_ref, o_ref):
    """Fused MLP forward for one batch tile; all operands resident in VMEM.

    Shapes inside the kernel:
      x_ref : (TB, F)   f32  (cast to bf16 in-kernel)
      w1_ref: (F, H)    bf16     b1_ref: (1, H)   f32
      w2_ref: (H, H)    bf16     b2_ref: (1, H)   f32
      w3_ref: (H, Cp)   bf16     b3_ref: (1, Cp)  f32
      o_ref : (TB, Cp)  bf16  (lane-dense padded class dim)
    Matmuls use bf16 operands with f32 accumulation; bias add + SiLU in f32.
    """
    x = x_ref[...].astype(jnp.bfloat16)

    # Linear 1 + SiLU
    h = jnp.dot(x, w1_ref[...], preferred_element_type=jnp.float32) + b1_ref[...]
    h = _silu(h)

    # Hidden Linear + SiLU (hidden_depth = 1)
    h = jnp.dot(h.astype(jnp.bfloat16), w2_ref[...],
                preferred_element_type=jnp.float32) + b2_ref[...]
    h = _silu(h)

    # Dropout(0.2) -> identity in eval mode.
    # TODO(synk): training-mode dropout (pltpu.prng_random_bits mask, scale 1/(1-p)).

    # Output Linear (class dim padded to a lane-dense width in prepare_params).
    out = jnp.dot(h.astype(jnp.bfloat16), w3_ref[...],
                  preferred_element_type=jnp.float32) + b3_ref[...]
    o_ref[...] = out.astype(o_ref.dtype)


def prepare_params(params, class_num):
    """One-time parameter prep (call once, reuse across forward calls):
    cast weights to bf16 for the MXU, pad the class dim of w3/b3 to a multiple
    of 128 (lane-dense output), reshape biases to (1, width) f32."""
    w1, b1 = params["w1"], params["b1"]
    w2, b2 = params["w2"], params["b2"]
    w3, b3 = params["w3"], params["b3"]
    H = w1.shape[1]
    C = class_num
    C_pad = _round_up(C, 128)
    if C_pad != C:
        w3 = jnp.pad(w3, ((0, 0), (0, C_pad - C)))
        b3 = jnp.pad(b3, (0, C_pad - C))
    return dict(
        w1=w1.astype(jnp.bfloat16),
        b1=b1.reshape(1, H).astype(jnp.float32),
        w2=w2.astype(jnp.bfloat16),
        b2=b2.reshape(1, H).astype(jnp.float32),
        w3=w3.astype(jnp.bfloat16),
        b3=b3.reshape(1, C_pad).astype(jnp.float32),
    )


@functools.partial(jax.jit, static_argnames=("class_num", "tile_b"))
def classifier_forward(x, prepped, *, class_num, tile_b=2048):
    """x: (B, F) float32. prepped: output of prepare_params. Returns (B, C) float32.

    tile_b: desired batch tile (rounded to a multiple of 16, clipped so the grid
    has >= 2 steps when B allows it, so both v7x TensorCores get work).
    """
    w1, b1 = prepped["w1"], prepped["b1"]
    w2, b2 = prepped["w2"], prepped["b2"]
    w3, b3 = prepped["w3"], prepped["b3"]

    B, F = x.shape
    H = w1.shape[1]
    C_pad = w3.shape[1]
    C = class_num

    # --- batch tiling: large tile to amortize per-step overhead, but >= 2 grid
    # steps when possible (v7x megacore), no padding of x (ragged last block OK
    # because every output row depends only on its own input row). ---
    tb = _round_up(min(tile_b, B), 16)
    if B > 8:
        tb = min(tb, _round_up(pl.cdiv(B, 2), 16))
    grid = (pl.cdiv(B, tb),)

    out = pl.pallas_call(
        mlp_kernel,
        out_shape=jax.ShapeDtypeStruct((B, C_pad), jnp.bfloat16),
        grid_spec=pltpu.PrefetchScalarGridSpec(
            num_scalar_prefetch=0,
            grid=grid,
            in_specs=[
                pl.BlockSpec((tb, F), lambda i: (i, 0)),       # x tile (streams)
                pl.BlockSpec((F, H), lambda i: (0, 0)),        # w1 (resident)
                pl.BlockSpec((1, H), lambda i: (0, 0)),        # b1 (resident)
                pl.BlockSpec((H, H), lambda i: (0, 0)),        # w2 (resident)
                pl.BlockSpec((1, H), lambda i: (0, 0)),        # b2 (resident)
                pl.BlockSpec((H, C_pad), lambda i: (0, 0)),    # w3 padded (resident)
                pl.BlockSpec((1, C_pad), lambda i: (0, 0)),    # b3 padded (resident)
            ],
            out_specs=pl.BlockSpec((tb, C_pad), lambda i: (i, 0)),
        ),
        compiler_params=pltpu.CompilerParams(
            dimension_semantics=("parallel",),
            vmem_limit_bytes=(48 * 1024 * 1024 if tb >= 4096 else None),
        ),
    )(x, w1, b1, w2, b2, w3, b3)

    # Fused class-dim slice + bf16->f32 cast (single consumer-side op).
    return out[:, :C].astype(jnp.float32)


def init_params(key, feature_dim, class_num, hidden_width):
    """Deterministic init mimicking torch.nn.Linear (uniform +/- 1/sqrt(fan_in))."""
    ks = jax.random.split(key, 6)

    def lin(kw, kb, fan_in, fan_out):
        bound = 1.0 / jnp.sqrt(jnp.float32(fan_in))
        w = jax.random.uniform(kw, (fan_in, fan_out), jnp.float32, -bound, bound)
        b = jax.random.uniform(kb, (fan_out,), jnp.float32, -bound, bound)
        return w, b

    w1, b1 = lin(ks[0], ks[1], feature_dim, hidden_width)
    w2, b2 = lin(ks[2], ks[3], hidden_width, hidden_width)
    w3, b3 = lin(ks[4], ks[5], hidden_width, class_num)
    return dict(w1=w1, b1=b1, w2=w2, b2=b2, w3=w3, b3=b3)


def reference_forward(x, params):
    """Pure-JAX f32 reference (Dropout eval-mode) for correctness checking."""
    h = x @ params["w1"] + params["b1"]
    h = h * jax.nn.sigmoid(h)
    h = h @ params["w2"] + params["b2"]
    h = h * jax.nn.sigmoid(h)
    return h @ params["w3"] + params["b3"]


if __name__ == "__main__":
    # Small shapes consistent with Classifier(feature_dim=32, class_num=16, hidden_width=128).
    # B=200 deliberately NOT a multiple of the tile so the ragged last grid block
    # (no batch padding) and the >=2-step grid path are both exercised.
    B, F, H, C = 200, 32, 128, 16

    key = jax.random.PRNGKey(0)
    kx, kp = jax.random.split(key)
    x = jax.random.normal(kx, (B, F), jnp.float32)
    params = init_params(kp, feature_dim=F, class_num=C, hidden_width=H)
    prepped = prepare_params(params, class_num=C)

    y = classifier_forward(x, prepped, class_num=C)
    y = jax.block_until_ready(y)

    y_ref = reference_forward(x, params)
    assert y.shape == (B, C), y.shape
    # bf16 MXU operands + bf16 output store (f32 accumulation inside the kernel)
    # -> loosened tolerance vs the f32 reference.
    max_err = float(jnp.max(jnp.abs(y - y_ref)))
    assert max_err < 5e-2, max_err
    print("KERNEL_OK")
</pallas_src>

<mosaic_0001>
module attributes {stable_mosaic.version = 11 : i64} {
  func.func @mlp_kernel(%arg0: i32, %arg1: memref<112x32xf32, #tpu.memory_space<vmem>>, %arg2: memref<32x128xbf16, #tpu.memory_space<vmem>>, %arg3: memref<1x128xf32, #tpu.memory_space<vmem>>, %arg4: memref<128x128xbf16, #tpu.memory_space<vmem>>, %arg5: memref<1x128xf32, #tpu.memory_space<vmem>>, %arg6: memref<128x128xbf16, #tpu.memory_space<vmem>>, %arg7: memref<1x128xf32, #tpu.memory_space<vmem>>, %arg8: memref<112x128xbf16, #tpu.memory_space<vmem>>) attributes {dimension_semantics = [#tpu.dimension_semantics<parallel>], iteration_bounds = array<i64: 2>, scalar_prefetch = 0 : i64, scratch_operands = 0 : i64, tpu.core_type = #tpu.core_type<tc>, window_params = [{transform_indices = @transform_0, window_bounds = array<i64: 112, 32>}, {pipeline_mode = #tpu.pipeline_mode<synchronous>, transform_indices = @transform_1, window_bounds = array<i64: 32, 128>}, {pipeline_mode = #tpu.pipeline_mode<synchronous>, transform_indices = @transform_2, window_bounds = array<i64: 1, 128>}, {pipeline_mode = #tpu.pipeline_mode<synchronous>, transform_indices = @transform_3, window_bounds = array<i64: 128, 128>}, {pipeline_mode = #tpu.pipeline_mode<synchronous>, transform_indices = @transform_4, window_bounds = array<i64: 1, 128>}, {pipeline_mode = #tpu.pipeline_mode<synchronous>, transform_indices = @transform_5, window_bounds = array<i64: 128, 128>}, {pipeline_mode = #tpu.pipeline_mode<synchronous>, transform_indices = @transform_6, window_bounds = array<i64: 1, 128>}, {transform_indices = @transform_7, window_bounds = array<i64: 112, 128>}]} {
    %c0 = arith.constant 0 : index
    %c0_0 = arith.constant 0 : index
    %0 = vector.load %arg1[%c0, %c0_0] : memref<112x32xf32, #tpu.memory_space<vmem>>, vector<112x32xf32>
    %1 = arith.truncf %0 : vector<112x32xf32> to vector<112x32xbf16>
    %c0_1 = arith.constant 0 : index
    %c0_2 = arith.constant 0 : index
    %2 = vector.load %arg2[%c0_1, %c0_2] : memref<32x128xbf16, #tpu.memory_space<vmem>>, vector<32x128xbf16>
    %cst = arith.constant dense<0.000000e+00> : vector<112x128xf32>
    %3 = tpu.matmul %1, %2, %cst {dimension_numbers = #tpu.dot_dimension_numbers<[1], [0], [0], [1], [0, 0, 1, 1], [], []>} : vector<112x32xbf16>, vector<32x128xbf16>, vector<112x128xf32> -> vector<112x128xf32>
    %c0_3 = arith.constant 0 : index
    %c0_4 = arith.constant 0 : index
    %4 = vector.load %arg3[%c0_3, %c0_4] : memref<1x128xf32, #tpu.memory_space<vmem>>, vector<1x128xf32>
    %5 = vector.broadcast %4 : vector<1x128xf32> to vector<112x128xf32>
    %6 = arith.addf %3, %5 : vector<112x128xf32>
    %cst_5 = arith.constant 0.000000e+00 : f32
    %7 = vector.broadcast %cst_5 : f32 to vector<112x128xf32>
    %8 = arith.subf %7, %6 : vector<112x128xf32>
    %9 = math.exp %8 : vector<112x128xf32>
    %cst_6 = arith.constant 1.000000e+00 : f32
    %10 = vector.broadcast %cst_6 : f32 to vector<112x128xf32>
    %11 = arith.addf %10, %9 : vector<112x128xf32>
    %12 = tpu.reciprocal %11 {approx = true} : vector<112x128xf32> -> vector<112x128xf32>
    %13 = arith.mulf %6, %12 : vector<112x128xf32>
    %14 = arith.truncf %13 : vector<112x128xf32> to vector<112x128xbf16>
    %c0_7 = arith.constant 0 : index
    %c0_8 = arith.constant 0 : index
    %15 = vector.load %arg4[%c0_7, %c0_8] : memref<128x128xbf16, #tpu.memory_space<vmem>>, vector<128x128xbf16>
    %cst_9 = arith.constant dense<0.000000e+00> : vector<112x128xf32>
    %16 = tpu.matmul %14, %15, %cst_9 {dimension_numbers = #tpu.dot_dimension_numbers<[1], [0], [0], [1], [0, 0, 1, 1], [], []>} : vector<112x128xbf16>, vector<128x128xbf16>, vector<112x128xf32> -> vector<112x128xf32>
    %c0_10 = arith.constant 0 : index
    %c0_11 = arith.constant 0 : index
    %17 = vector.load %arg5[%c0_10, %c0_11] : memref<1x128xf32, #tpu.memory_space<vmem>>, vector<1x128xf32>
    %18 = vector.broadcast %17 : vector<1x128xf32> to vector<112x128xf32>
    %19 = arith.addf %16, %18 : vector<112x128xf32>
    %cst_12 = arith.constant 0.000000e+00 : f32
    %20 = vector.broadcast %cst_12 : f32 to vector<112x128xf32>
    %21 = arith.subf %20, %19 : vector<112x128xf32>
    %22 = math.exp %21 : vector<112x128xf32>
    %cst_13 = arith.constant 1.000000e+00 : f32
    %23 = vector.broadcast %cst_13 : f32 to vector<112x128xf32>
    %24 = arith.addf %23, %22 : vector<112x128xf32>
    %25 = tpu.reciprocal %24 {approx = true} : vector<112x128xf32> -> vector<112x128xf32>
    %26 = arith.mulf %19, %25 : vector<112x128xf32>
    %27 = arith.truncf %26 : vector<112x128xf32> to vector<112x128xbf16>
    %c0_14 = arith.constant 0 : index
    %c0_15 = arith.constant 0 : index
    %28 = vector.load %arg6[%c0_14, %c0_15] : memref<128x128xbf16, #tpu.memory_space<vmem>>, vector<128x128xbf16>
    %cst_16 = arith.constant dense<0.000000e+00> : vector<112x128xf32>
    %29 = tpu.matmul %27, %28, %cst_16 {dimension_numbers = #tpu.dot_dimension_numbers<[1], [0], [0], [1], [0, 0, 1, 1], [], []>} : vector<112x128xbf16>, vector<128x128xbf16>, vector<112x128xf32> -> vector<112x128xf32>
    %c0_17 = arith.constant 0 : index
    %c0_18 = arith.constant 0 : index
    %30 = vector.load %arg7[%c0_17, %c0_18] : memref<1x128xf32, #tpu.memory_space<vmem>>, vector<1x128xf32>
    %31 = vector.broadcast %30 : vector<1x128xf32> to vector<112x128xf32>
    %32 = arith.addf %29, %31 : vector<112x128xf32>
    %33 = arith.truncf %32 : vector<112x128xf32> to vector<112x128xbf16>
    %c0_19 = arith.constant 0 : index
    %c0_20 = arith.constant 0 : index
    %34 = vector.load %arg8[%c0_19, %c0_20] : memref<112x128xbf16, #tpu.memory_space<vmem>>, vector<112x128xbf16>
    tpu.vector_store %arg8[%c0_19, %c0_20], %33 {strides = array<i32>} : memref<112x128xbf16, #tpu.memory_space<vmem>>, vector<112x128xbf16>,
    return
  }
  func.func @transform_0(%arg0: i32) -> (i32, i32) {
    %c0_i32 = arith.constant 0 : i32
    %c0_i32_0 = arith.constant 0 : i32
    return %arg0, %c0_i32 : i32, i32
  }
  func.func @transform_1(%arg0: i32) -> (i32, i32) {
    %c0_i32 = arith.constant 0 : i32
    %c0_i32_0 = arith.constant 0 : i32
    %c0_i32_1 = arith.constant 0 : i32
    return %c0_i32, %c0_i32_0 : i32, i32
  }
  func.func @transform_2(%arg0: i32) -> (i32, i32) {
    %c0_i32 = arith.constant 0 : i32
    %c0_i32_0 = arith.constant 0 : i32
    %c0_i32_1 = arith.constant 0 : i32
    return %c0_i32, %c0_i32_0 : i32, i32
  }
  func.func @transform_3(%arg0: i32) -> (i32, i32) {
    %c0_i32 = arith.constant 0 : i32
    %c0_i32_0 = arith.constant 0 : i32
    %c0_i32_1 = arith.constant 0 : i32
    return %c0_i32, %c0_i32_0 : i32, i32
  }
  func.func @transform_4(%arg0: i32) -> (i32, i32) {
    %c0_i32 = arith.constant 0 : i32
    %c0_i32_0 = arith.constant 0 : i32
    %c0_i32_1 = arith.constant 0 : i32
    return %c0_i32, %c0_i32_0 : i32, i32
  }
  func.func @transform_5(%arg0: i32) -> (i32, i32) {
    %c0_i32 = arith.constant 0 : i32
    %c0_i32_0 = arith.constant 0 : i32
    %c0_i32_1 = arith.constant 0 : i32
    return %c0_i32, %c0_i32_0 : i32, i32
  }
  func.func @transform_6(%arg0: i32) -> (i32, i32) {
    %c0_i32 = arith.constant 0 : i32
    %c0_i32_0 = arith.constant 0 : i32
    %c0_i32_1 = arith.constant 0 : i32
    return %c0_i32, %c0_i32_0 : i32, i32
  }
  func.func @transform_7(%arg0: i32) -> (i32, i32) {
    %c0_i32 = arith.constant 0 : i32
    %c0_i32_0 = arith.constant 0 : i32
    return %arg0, %c0_i32 : i32, i32
  }
}

</mosaic_0001>

<llo_original>
// kernel: classifier_forward.1
$region0: #{classifier_forward.1}
  #allocation0 [shape = 'u32[]', space=smem, size = 0x4, offset = 0x4, fixed_abs, tag = 'smem constant byte address 0x4 - core index']
  #allocation1 [shape = 'u32[144,128]{1,0:T(1,128)}', space=vmem, size = 0x12000, scoped, tag = 'internal scratch']
  %s0 = inlined_call_operand.vmem [shape: f32[200,32], index: 0, kind: input, shape index: {}]
  %s1 = inlined_call_operand.vmem [shape: bf16[32,128], index: 1, kind: input, shape index: {}]
  %s2 = inlined_call_operand.vmem [shape: f32[1,128], index: 2, kind: input, shape index: {}]
  %s3 = inlined_call_operand.vmem [shape: bf16[128,128], index: 3, kind: input, shape index: {}]
  %s4 = inlined_call_operand.vmem [shape: f32[1,128], index: 4, kind: input, shape index: {}]
  %s5 = inlined_call_operand.vmem [shape: bf16[128,128], index: 5, kind: input, shape index: {}]
  %s6 = inlined_call_operand.vmem [shape: f32[1,128], index: 6, kind: input, shape index: {}]
  %s7 = inlined_call_operand.vmem [shape: bf16[200,128], index: 7, kind: output, shape index: {}]
  %s8 = sld [smem:[#allocation0]]
  $region105: #{classifier_forward.1} parent=0
    _
  %s10 = ssub.s32 1, %s8
  %s11 = scalar_select 0, %s10, %s8
  $region1: #{classifier_forward.1} parent=0
    #allocation2 [shape = 'u8[57344]{0}', space=vmem, size = 0xe000, scoped, tag = 'output window, operand 0']
    loop: start=0, step=1, limit=4
    $region2: #{classifier_forward.1} parent=1 // loop_pre_header
      _
    $region3: #{classifier_forward.1} parent=1 // loop_header
      %s13 = sphi 0, %s17
      %p14 = scmp.ge.s32.totalorder %s13, 4
      %s23 = sphi 0, %s25
      %s26 = sphi 0, %s23
      %s27 = sphi 0, %s26
      %s43 = sphi 0, %s27
      %s47 = sphi 0, %s47
      %s49 = sphi 0, %s47
      %s50 = sphi 0, %s49
      %s64 = sphi 0, %s50
      %s68 = sphi 0, %s68
      %s70 = sphi 0, %s68
      %s71 = sphi 0, %s70
      %s85 = sphi 0, %s71
      %s89 = sphi 0, %s89
      %s91 = sphi 0, %s89
      %s92 = sphi 0, %s91
      %s106 = sphi 0, %s92
      %s110 = sphi 0, %s110
      %s112 = sphi 0, %s110
      %s113 = sphi 0, %s112
      %s127 = sphi 0, %s113
      %s131 = sphi 0, %s131
      %s133 = sphi 0, %s131
      %s134 = sphi 0, %s133
      %s148 = sphi 0, %s134
      %s152 = sphi 0, %s152
      %s154 = sphi 0, %s152
      %s155 = sphi 0, %s154
      %s169 = sphi 0, %s155
      %s175 = sphi 0, %s177
      %s178 = sphi 0, %s175
      %s179 = sphi 0, %s178
      %s195 = sphi 0, %s179
    $region4: #{classifier_forward.1} parent=1 // loop_header_branch
      %16 = sbr.rel (%p14) target = $region8
    $region5: #{classifier_forward.1} parent=1 // loop_body
      %s18 = ssub.s32 %s13, 1
      %s19 = ssub.s32 %s13, 2
      %s20 = sadd.s32 %s13, 1
      %s21 = ssub.s32 %s13, %s20
      %p22 = scmp.eq.s32.totalorder %s21, 0
      %s24 = sadd.s32 %s23, 1
      %s25 = scalar_select %p22, %s23, %s24
      %p28 = pneg %p22
      %p29 = scmp.eq.s32.totalorder %s13, 1
      %p30 = por %p28, %p29
      %p31 = scmp.ne.s32.totalorder %s23, %s26
      %p32 = scmp.eq.s32.totalorder %s13, 0
      %p33 = por %p31, %p32
      %p34 = scmp.ne.s32.totalorder %s23, %s26
      %p35 = scmp.eq.s32.totalorder %s18, 1
      %p36 = por %p34, %p35
      %p37 = scmp.ne.s32.totalorder %s26, %s27
      %p38 = scmp.eq.s32.totalorder %s18, 0
      %p39 = por %p37, %p38
      %p40 = scmp.ne.s32.totalorder %s26, %s27
      %p41 = scmp.eq.s32.totalorder %s19, 1
      %p42 = por %p40, %p41
      %p44 = scmp.ne.s32.totalorder %s27, %s43
      %p45 = scmp.eq.s32.totalorder %s19, 0
      %p46 = por %p44, %p45
      %s48 = sadd.s32 %s47, 1
      %p51 = scmp.eq.s32.totalorder %s13, 1
      %p52 = scmp.ne.s32.totalorder %s47, %s49
      %p53 = scmp.eq.s32.totalorder %s13, 0
      %p54 = por %p52, %p53
      %p55 = scmp.ne.s32.totalorder %s47, %s49
      %p56 = scmp.eq.s32.totalorder %s18, 1
      %p57 = por %p55, %p56
      %p58 = scmp.ne.s32.totalorder %s49, %s50
      %p59 = scmp.eq.s32.totalorder %s18, 0
      %p60 = por %p58, %p59
      %p61 = scmp.ne.s32.totalorder %s49, %s50
      %p62 = scmp.eq.s32.totalorder %s19, 1
      %p63 = por %p61, %p62
      %p65 = scmp.ne.s32.totalorder %s50, %s64
      %p66 = scmp.eq.s32.totalorder %s19, 0
      %p67 = por %p65, %p66
      %s69 = sadd.s32 %s68, 1
      %p72 = scmp.eq.s32.totalorder %s13, 1
      %p73 = scmp.ne.s32.totalorder %s68, %s70
      %p74 = scmp.eq.s32.totalorder %s13, 0
      %p75 = por %p73, %p74
      %p76 = scmp.ne.s32.totalorder %s68, %s70
      %p77 = scmp.eq.s32.totalorder %s18, 1
      %p78 = por %p76, %p77
      %p79 = scmp.ne.s32.totalorder %s70, %s71
      %p80 = scmp.eq.s32.totalorder %s18, 0
      %p81 = por %p79, %p80
      %p82 = scmp.ne.s32.totalorder %s70, %s71
      %p83 = scmp.eq.s32.totalorder %s19, 1
      %p84 = por %p82, %p83
      %p86 = scmp.ne.s32.totalorder %s71, %s85
      %p87 = scmp.eq.s32.totalorder %s19, 0
      %p88 = por %p86, %p87
      %s90 = sadd.s32 %s89, 1
      %p93 = scmp.eq.s32.totalorder %s13, 1
      %p94 = scmp.ne.s32.totalorder %s89, %s91
      %p95 = scmp.eq.s32.totalorder %s13, 0
      %p96 = por %p94, %p95
      %p97 = scmp.ne.s32.totalorder %s89, %s91
      %p98 = scmp.eq.s32.totalorder %s18, 1
      %p99 = por %p97, %p98
      %p100 = scmp.ne.s32.totalorder %s91, %s92
      %p101 = scmp.eq.s32.totalorder %s18, 0
      %p102 = por %p100, %p101
      %p103 = scmp.ne.s32.totalorder %s91, %s92
      %p104 = scmp.eq.s32.totalorder %s19, 1
      %p105 = por %p103, %p104
      %p107 = scmp.ne.s32.totalorder %s92, %s106
      %p108 = scmp.eq.s32.totalorder %s19, 0
      %p109 = por %p107, %p108
      %s111 = sadd.s32 %s110, 1
      %p114 = scmp.eq.s32.totalorder %s13, 1
      %p115 = scmp.ne.s32.totalorder %s110, %s112
      %p116 = scmp.eq.s32.totalorder %s13, 0
      %p117 = por %p115, %p116
      %p118 = scmp.ne.s32.totalorder %s110, %s112
      %p119 = scmp.eq.s32.totalorder %s18, 1
      %p120 = por %p118, %p119
      %p121 = scmp.ne.s32.totalorder %s112, %s113
      %p122 = scmp.eq.s32.totalorder %s18, 0
      %p123 = por %p121, %p122
      %p124 = scmp.ne.s32.totalorder %s112, %s113
      %p125 = scmp.eq.s32.totalorder %s19, 1
      %p126 = por %p124, %p125
      %p128 = scmp.ne.s32.totalorder %s113, %s127
      %p129 = scmp.eq.s32.totalorder %s19, 0
      %p130 = por %p128, %p129
      %s132 = sadd.s32 %s131, 1
      %p135 = scmp.eq.s32.totalorder %s13, 1
      %p136 = scmp.ne.s32.totalorder %s131, %s133
      %p137 = scmp.eq.s32.totalorder %s13, 0
      %p138 = por %p136, %p137
      %p139 = scmp.ne.s32.totalorder %s131, %s133
      %p140 = scmp.eq.s32.totalorder %s18, 1
      %p141 = por %p139, %p140
      %p142 = scmp.ne.s32.totalorder %s133, %s134
      %p143 = scmp.eq.s32.totalorder %s18, 0
      %p144 = por %p142, %p143
      %p145 = scmp.ne.s32.totalorder %s133, %s134
      %p146 = scmp.eq.s32.totalorder %s19, 1
      %p147 = por %p145, %p146
      %p149 = scmp.ne.s32.totalorder %s134, %s148
      %p150 = scmp.eq.s32.totalorder %s19, 0
      %p151 = por %p149, %p150
      %s153 = sadd.s32 %s152, 1
      %p156 = scmp.eq.s32.totalorder %s13, 1
      %p157 = scmp.ne.s32.totalorder %s152, %s154
      %p158 = scmp.eq.s32.totalorder %s13, 0
      %p159 = por %p157, %p158
      %p160 = scmp.ne.s32.totalorder %s152, %s154
      %p161 = scmp.eq.s32.totalorder %s18, 1
      %p162 = por %p160, %p161
      %p163 = scmp.ne.s32.totalorder %s154, %s155
      %p164 = scmp.eq.s32.totalorder %s18, 0
      %p165 = por %p163, %p164
      %p166 = scmp.ne.s32.totalorder %s154, %s155
      %p167 = scmp.eq.s32.totalorder %s19, 1
      %p168 = por %p166, %p167
      %p170 = scmp.ne.s32.totalorder %s155, %s169
      %p171 = scmp.eq.s32.totalorder %s19, 0
      %p172 = por %p170, %p171
      %s173 = ssub.s32 %s13, %s20
      %p174 = scmp.eq.s32.totalorder %s173, 0
      %s176 = sadd.s32 %s175, 1
      %s177 = scalar_select %p174, %s175, %s176
      %p180 = pneg %p174
      %p181 = scmp.eq.s32.totalorder %s13, 1
      %p182 = por %p180, %p181
      %p183 = scmp.ne.s32.totalorder %s175, %s178
      %p184 = scmp.eq.s32.totalorder %s13, 0
      %p185 = por %p183, %p184
      %p186 = scmp.ne.s32.totalorder %s175, %s178
      %p187 = scmp.eq.s32.totalorder %s18, 1
      %p188 = por %p186, %p187
      %p189 = scmp.ne.s32.totalorder %s178, %s179
      %p190 = scmp.eq.s32.totalorder %s18, 0
      %p191 = por %p189, %p190
      %p192 = scmp.ne.s32.totalorder %s178, %s179
      %p193 = scmp.eq.s32.totalorder %s19, 1
      %p194 = por %p192, %p193
      %p196 = scmp.ne.s32.totalorder %s179, %s195
      %p197 = scmp.eq.s32.totalorder %s19, 0
      %p198 = por %p196, %p197
      %p199 = scmp.le.s32.totalorder 1, %s13
      %p200 = scmp.lt.s32.totalorder %s13, 3
      %p201 = pnand %p199, %p200
      %p202 = pneg %p201
      // Predicated region
      $region9: #{classifier_forward.1} parent=5 // pred_check
        _
      $region10: #{classifier_forward.1} parent=5 // pred_check_branch
        %204 = sbr.rel (%p201) target = $region12
      $region11: #{classifier_forward.1} parent=5 // pred_region
        %s205 = ssub.s32 %s13, 1
        // Predicated region
        $region13: #{classifier_forward.1} parent=11 // pred_check
          %p206 = pneg %p60
        $region14: #{classifier_forward.1} parent=11 // pred_check_branch
          %208 = sbr.rel (%p206) target = $region16
        $region15: #{classifier_forward.1} parent=11 // pred_region
          _
        $region16: #{classifier_forward.1} parent=11 // pred_fallthru
          _
        // Predicated region
        $region17: #{classifier_forward.1} parent=11 // pred_check
          %p209 = pneg %p81
        $region18: #{classifier_forward.1} parent=11 // pred_check_branch
          %211 = sbr.rel (%p209) target = $region20
        $region19: #{classifier_forward.1} parent=11 // pred_region
          _
        $region20: #{classifier_forward.1} parent=11 // pred_fallthru
          _
        // Predicated region
        $region21: #{classifier_forward.1} parent=11 // pred_check
          %p212 = pneg %p102
        $region22: #{classifier_forward.1} parent=11 // pred_check_branch
          %214 = sbr.rel (%p212) target = $region24
        $region23: #{classifier_forward.1} parent=11 // pred_region
          _
        $region24: #{classifier_forward.1} parent=11 // pred_fallthru
          _
        // Predicated region
        $region25: #{classifier_forward.1} parent=11 // pred_check
          %p215 = pneg %p123
        $region26: #{classifier_forward.1} parent=11 // pred_check_branch
          %217 = sbr.rel (%p215) target = $region28
        $region27: #{classifier_forward.1} parent=11 // pred_region
          _
        $region28: #{classifier_forward.1} parent=11 // pred_fallthru
          _
        // Predicated region
        $region29: #{classifier_forward.1} parent=11 // pred_check
          %p218 = pneg %p144
        $region30: #{classifier_forward.1} parent=11 // pred_check_branch
          %220 = sbr.rel (%p218) target = $region32
        $region31: #{classifier_forward.1} parent=11 // pred_region
          _
        $region32: #{classifier_forward.1} parent=11 // pred_fallthru
          _
        // Predicated region
        $region33: #{classifier_forward.1} parent=11 // pred_check
          %p221 = pneg %p165
        $region34: #{classifier_forward.1} parent=11 // pred_check_branch
          %223 = sbr.rel (%p221) target = $region36
        $region35: #{classifier_forward.1} parent=11 // pred_region
          _
        $region36: #{classifier_forward.1} parent=11 // pred_fallthru
          _
      $region12: #{classifier_forward.1} parent=5 // pred_fallthru
        _
      %p224 = scmp.lt.s32.totalorder %s13, 2
      // Predicated region
      $region37: #{classifier_forward.1} parent=5 // pred_check
        %p225 = pneg %p224
      $region38: #{classifier_forward.1} parent=5 // pred_check_branch
        %227 = sbr.rel (%p225) target = $region40
      $region39: #{classifier_forward.1} parent=5 // pred_region
        // Predicated region
        $region41: #{classifier_forward.1} parent=39 // pred_check
          %p228 = pneg %p33
        $region42: #{classifier_forward.1} parent=39 // pred_check_branch
          %230 = sbr.rel (%p228) target = $region44
        $region43: #{classifier_forward.1} parent=39 // pred_region
          %s231 = smul.u32 14, %s13
          %s232 = ssub.s32 25, %s231
          %p233 = scmp.lt.s32.totalorder %s232, 14
          %s234 = scalar_select %p233, %s232, 14
          %s235 = smul.u32 128, %s234
          %p236 = scmp.lt.s32.totalorder %s231, 24
          %s237 = scalar_select %p236, %s231, 24
          %s238 = smul.addr %s237, 8
          %s239 = scalar_lea.vmem %s0, %s238
          %s240 = smul.u32 14, %s13
          %s241 = ssub.s32 25, %s240
          %p242 = scmp.lt.s32.totalorder %s241, 14
          %s243 = scalar_select %p242, %s241, 14
          %s244 = smul.u32 128, %s243
        $region44: #{classifier_forward.1} parent=39 // pred_fallthru
          _
      $region40: #{classifier_forward.1} parent=5 // pred_fallthru
        _
      %p245 = scmp.le.s32.totalorder 1, %s13
      %p246 = scmp.lt.s32.totalorder %s13, 3
      %p247 = pnand %p245, %p246
      %p248 = pneg %p247
      // Predicated region
      $region45: #{classifier_forward.1} parent=5 // pred_check
        _
      $region46: #{classifier_forward.1} parent=5 // pred_check_branch
        %250 = sbr.rel (%p247) target = $region48
      $region47: #{classifier_forward.1} parent=5 // pred_region
        %s251 = ssub.s32 %s13, 1
        %s252 = smul.u32 14, %s18
        %s253 = ssub.s32 25, %s252
        %p254 = scmp.lt.s32.totalorder %s253, 14
        %s255 = scalar_select %p254, %s253, 14
        %s256 = smul.u32 128, %s255
        %p257 = scmp.lt.s32.totalorder %s252, 24
        %s258 = scalar_select %p257, %s252, 24
        %s259 = smul.addr %s258, 8
        %s260 = scalar_lea.vmem %s0, %s259
        %p261 = pneg %p39
        %p262 = pneg %p36
        %p263 = pneg %p60
        %p264 = pneg %p57
        %p265 = pneg %p81
        %p266 = pneg %p78
        %p267 = pneg %p102
        %p268 = pneg %p99
        %p269 = pneg %p123
        %p270 = pneg %p120
        %p271 = pneg %p144
        %p272 = pneg %p141
        %p273 = pneg %p165
        %p274 = pneg %p162
        %p275 = pneg %p191
        %p276 = pneg %p188
        %s277 = sand.u32 %s178, 1
        %s278 = sand.u32 %s178, 1
        %s279 = smul.addr %s278, 56
        %s280 = scalar_lea.vmem [#allocation2], %s279
        %s281 = smul.u32 14, %s18
        %s282 = ssub.s32 25, %s281
        %p283 = scmp.lt.s32.totalorder %s282, 14
        %s284 = scalar_select %p283, %s282, 14
        %s285 = smul.u32 128, %s284
        %p286 = scmp.lt.s32.totalorder %s281, 24
        %s287 = scalar_select %p286, %s281, 24
        %s288 = smul.addr %s287, 8
        %s289 = scalar_lea.vmem %s0, %s288
        %s290 = smul.u32 14, %s18
        %s291 = ssub.s32 25, %s290
        %p292 = scmp.lt.s32.totalorder %s291, 14
        %s293 = scalar_select %p292, %s291, 14
        %s294 = smul.u32 128, %s293
        %s295 = smul.u32 14, %s18
        %s296 = ssub.s32 25, %s295
        %p297 = scmp.lt.s32.totalorder %s296, 14
        %s298 = scalar_select %p297, %s296, 14
        %s299 = smul.u32 64, %s298
        %v301 = vld [vmem:[%s289] sm:$0xff]
        %v302 = vld [vmem:[%s289 + $0x8] sm:$0xff]
        %v303 = vld [vmem:[%s289 + $0x10] sm:$0xff]
        %v304 = vld [vmem:[%s289 + $0x18] sm:$0xff]
        %v305 = vld [vmem:[%s289 + $0x20] sm:$0xff]
        %v306 = vld [vmem:[%s289 + $0x28] sm:$0xff]
        %v307 = vld [vmem:[%s289 + $0x30] sm:$0xff]
        %v308 = vld [vmem:[%s289 + $0x38] sm:$0xff]
        %v309 = vld [vmem:[%s289 + $0x40] sm:$0xff]
        %v310 = vld [vmem:[%s289 + $0x48] sm:$0xff]
        %v311 = vld [vmem:[%s289 + $0x50] sm:$0xff]
        %v312 = vld [vmem:[%s289 + $0x58] sm:$0xff]
        %v313 = vld [vmem:[%s289 + $0x60] sm:$0xff]
        %v314 = vld [vmem:[%s289 + $0x68] sm:$0xff]
        %v315 = vpack.c.bf16 %v302, %v301
        %v316 = vpack.c.bf16 %v304, %v303
        %v317 = vpack.c.bf16 %v306, %v305
        %v318 = vpack.c.bf16 %v308, %v307
        %v319 = vpack.c.bf16 %v310, %v309
        %v320 = vpack.c.bf16 %v312, %v311
        %v321 = vpack.c.bf16 %v314, %v313
        %v322 = vld [vmem:[%s1] sm:$0xf]
        %v323 = vld [vmem:[%s1 + $0x4] sm:$0xf]
        %v324 = vld [vmem:[%s1 + $0x8] sm:$0xf]
        %v325 = vld [vmem:[%s1 + $0xc] sm:$0xf]
        %v326 = vld [vmem:[%s2] sm:$0x1]
        %v328 = vlaneseq
        %v329 = vshrl.u32 %v328, 7
        %v330 = vsub.s32 0, %v329
        %v331 = vrot.slane %v326, %v330
        %v337 = vunpack.c.l.b16 %v322
        %v338 = vunpack.c.l.b16 %v323
        %v339 = vunpack.c.l.b16 %v324
        %v340 = vunpack.c.l.b16 %v325
        %v341 = vpack.c.b16 %v338, %v337
        %v342 = vpack.c.b16 %v340, %v339
        %vm345 = vcmask 261120
        %v347 = vsel %vm345, %v315, 0
        %v350 = vsel %vm345, %v316, 0
        %v353 = vsel %vm345, %v317, 0
        %v356 = vsel %vm345, %v318, 0
        %v359 = vsel %vm345, %v319, 0
        %v362 = vsel %vm345, %v320, 0
        %v365 = vsel %vm345, %v321, 0
        %367 = vmatprep.subr.bf16.mxu0 0
        %368 = vmatpush1.bf16.msra.mxu0 0
        %369 = vmatprep.subr.bf16.mxu0 0
        %370 = vmatpush1.bf16.msra.mxu0 0
        %371 = vmatprep.subr.bf16.mxu0 0
        %372 = vmatpush1.bf16.msra.mxu0 0
        %373 = vmatprep.subr.bf16.mxu0 0
        %374 = vmatpush1.bf16.msra.mxu0 0
        %375 = vmatprep.subr.bf16.mxu0 0
        %376 = vmatpush1.bf16.msra.mxu0 0
        %377 = vmatprep.subr.bf16.mxu0 0
        %378 = vmatpush1.bf16.msra.mxu0 0
        %379 = vmatprep.subr.bf16.mxu0 0
        %380 = vmatpush1.bf16.msra.mxu0 %v342
        %381 = vmatprep.subr.bf16.mxu0 0
        %382 = vmatpush1.bf16.msra.mxu0 %v341
        %383 = vmatprep.subr.bf16.mxu0 0
        %384 = vmatpush2.bf16.msra.mxu0 0
        %385 = vmatprep.subr.bf16.mxu0 0
        %386 = vmatpush2.bf16.msra.mxu0 0
        %387 = vmatprep.subr.bf16.mxu0 0
        %388 = vmatpush2.bf16.msra.mxu0 0
        %389 = vmatprep.subr.bf16.mxu0 0
        %390 = vmatpush2.bf16.msra.mxu0 0
        %391 = vmatprep.subr.bf16.mxu0 0
        %392 = vmatpush2.bf16.msra.mxu0 0
        %393 = vmatprep.subr.bf16.mxu0 0
        %394 = vmatpush2.bf16.msra.mxu0 0
        %395 = vmatprep.subr.bf16.mxu0 0
        %396 = vmatpush2.bf16.msra.mxu0 0
        %397 = vmatprep.subr.bf16.mxu0 0
        %398 = vmatpush2.bf16.msra.mxu0 0
        %399 = vmatprep.mubr.bf16.mxu0 0
        %400 = vmatmul.mubr.bf16.gmra.mxu0 %v347
        %v401 = vpop.f32.mrf.mxu0
        %v402 = vadd.f32 %v331, %v401
        %v403 = vpop.f32.mrf.mxu0
        %v404 = vpop.f32.mrf.mxu0
        %v405 = vadd.f32 %v331, %v404
        %v406 = vpop.f32.mrf.mxu0
        %407 = vmatprep.mubr.bf16.mxu0 0
        %408 = vmatmul.mubr.bf16.gmra.mxu0 %v350
        %v409 = vpop.f32.mrf.mxu0
        %v410 = vadd.f32 %v331, %v409
        %v411 = vpop.f32.mrf.mxu0
        %v412 = vpop.f32.mrf.mxu0
        %v413 = vadd.f32 %v331, %v412
        %v414 = vpop.f32.mrf.mxu0
        %415 = vmatprep.mubr.bf16.mxu0 0
        %416 = vmatmul.mubr.bf16.gmra.mxu0 %v353
        %v417 = vpop.f32.mrf.mxu0
        %v418 = vadd.f32 %v331, %v417
        %v419 = vpop.f32.mrf.mxu0
        %v420 = vpop.f32.mrf.mxu0
        %v421 = vadd.f32 %v331, %v420
        %v422 = vpop.f32.mrf.mxu0
        %423 = vmatprep.mubr.bf16.mxu0 0
        %424 = vmatmul.mubr.bf16.gmra.mxu0 %v356
        %v425 = vpop.f32.mrf.mxu0
        %v426 = vadd.f32 %v331, %v425
        %v427 = vpop.f32.mrf.mxu0
        %v428 = vpop.f32.mrf.mxu0
        %v429 = vadd.f32 %v331, %v428
        %v430 = vpop.f32.mrf.mxu0
        %431 = vmatprep.mubr.bf16.mxu0 0
        %432 = vmatmul.mubr.bf16.gmra.mxu0 %v359
        %v433 = vpop.f32.mrf.mxu0
        %v434 = vadd.f32 %v331, %v433
        %v435 = vpop.f32.mrf.mxu0
        %v436 = vpop.f32.mrf.mxu0
        %v437 = vadd.f32 %v331, %v436
        %v438 = vpop.f32.mrf.mxu0
        %439 = vmatprep.mubr.bf16.mxu0 0
        %440 = vmatmul.mubr.bf16.gmra.mxu0 %v362
        %v441 = vpop.f32.mrf.mxu0
        %v442 = vadd.f32 %v331, %v441
        %v443 = vpop.f32.mrf.mxu0
        %v444 = vpop.f32.mrf.mxu0
        %v445 = vadd.f32 %v331, %v444
        %v446 = vpop.f32.mrf.mxu0
        %447 = vmatprep.mubr.bf16.mxu0 0
        %448 = vmatmul.mubr.bf16.gmra.mxu0 %v365
        %v449 = vpop.f32.mrf.mxu0
        %v450 = vadd.f32 %v331, %v449
        %v451 = vpop.f32.mrf.mxu0
        %v452 = vpop.f32.mrf.mxu0
        %v453 = vadd.f32 %v331, %v452
        %v454 = vpop.f32.mrf.mxu0
        %455 = vdwg.mxu0
        %v456 = vsub.f32 0.0, %v402
        %v457 = vsub.f32 0.0, %v405
        %v458 = vsub.f32 0.0, %v410
        %v459 = vsub.f32 0.0, %v413
        %v460 = vsub.f32 0.0, %v418
        %v461 = vsub.f32 0.0, %v421
        %v462 = vsub.f32 0.0, %v426
        %v463 = vsub.f32 0.0, %v429
        %v464 = vsub.f32 0.0, %v434
        %v465 = vsub.f32 0.0, %v437
        %v466 = vsub.f32 0.0, %v442
        %v467 = vsub.f32 0.0, %v445
        %v468 = vsub.f32 0.0, %v450
        %v469 = vsub.f32 0.0, %v453
        %v470 = vmul.f32 %v456, 1.442695
        %v471 = vpow.pop %v470
        %v472 = vmul.f32 %v457, 1.442695
        %v473 = vpow.pop %v472
        %v474 = vmul.f32 %v458, 1.442695
        %v475 = vpow.pop %v474
        %v476 = vmul.f32 %v459, 1.442695
        %v477 = vpow.pop %v476
        %v478 = vmul.f32 %v460, 1.442695
        %v479 = vpow.pop %v478
        %v480 = vmul.f32 %v461, 1.442695
        %v481 = vpow.pop %v480
        %v482 = vmul.f32 %v462, 1.442695
        %v483 = vpow.pop %v482
        %v484 = vmul.f32 %v463, 1.442695
        %v485 = vpow.pop %v484
        %v486 = vmul.f32 %v464, 1.442695
        %v487 = vpow.pop %v486
        %v488 = vmul.f32 %v465, 1.442695
        %v489 = vpow.pop %v488
        %v490 = vmul.f32 %v466, 1.442695
        %v491 = vpow.pop %v490
        %v492 = vmul.f32 %v467, 1.442695
        %v493 = vpow.pop %v492
        %v494 = vmul.f32 %v468, 1.442695
        %v495 = vpow.pop %v494
        %v496 = vmul.f32 %v469, 1.442695
        %v497 = vpow.pop %v496
        %v498 = vadd.f32 %v471, 1.0
        %v499 = vadd.f32 %v473, 1.0
        %v500 = vadd.f32 %v475, 1.0
        %v501 = vadd.f32 %v477, 1.0
        %v502 = vadd.f32 %v479, 1.0
        %v503 = vadd.f32 %v481, 1.0
        %v504 = vadd.f32 %v483, 1.0
        %v505 = vadd.f32 %v485, 1.0
        %v506 = vadd.f32 %v487, 1.0
        %v507 = vadd.f32 %v489, 1.0
        %v508 = vadd.f32 %v491, 1.0
        %v509 = vadd.f32 %v493, 1.0
        %v510 = vadd.f32 %v495, 1.0
        %v511 = vadd.f32 %v497, 1.0
        %v512 = vrcp.pop %v498
        %v513 = vrcp.pop %v499
        %v514 = vrcp.pop %v500
        %v515 = vrcp.pop %v501
        %v516 = vrcp.pop %v502
        %v517 = vrcp.pop %v503
        %v518 = vrcp.pop %v504
        %v519 = vrcp.pop %v505
        %v520 = vrcp.pop %v506
        %v521 = vrcp.pop %v507
        %v522 = vrcp.pop %v508
        %v523 = vrcp.pop %v509
        %v524 = vrcp.pop %v510
        %v525 = vrcp.pop %v511
        %v526 = vmul.f32 %v402, %v512
        %v527 = vmul.f32 %v405, %v513
        %v528 = vmul.f32 %v410, %v514
        %v529 = vmul.f32 %v413, %v515
        %v530 = vmul.f32 %v418, %v516
        %v531 = vmul.f32 %v421, %v517
        %v532 = vmul.f32 %v426, %v518
        %v533 = vmul.f32 %v429, %v519
        %v534 = vmul.f32 %v434, %v520
        %v535 = vmul.f32 %v437, %v521
        %v536 = vmul.f32 %v442, %v522
        %v537 = vmul.f32 %v445, %v523
        %v538 = vmul.f32 %v450, %v524
        %v539 = vmul.f32 %v453, %v525
        %v540 = vpack.c.bf16 %v527, %v526
        %v541 = vpack.c.bf16 %v529, %v528
        %v542 = vpack.c.bf16 %v531, %v530
        %v543 = vpack.c.bf16 %v533, %v532
        %v544 = vpack.c.bf16 %v535, %v534
        %v545 = vpack.c.bf16 %v537, %v536
        %v546 = vpack.c.bf16 %v539, %v538
        %v547 = vld [vmem:[%s3] sm:$0xf]
        %v548 = vld [vmem:[%s3 + $0x4] sm:$0xf]
        %v549 = vld [vmem:[%s3 + $0x8] sm:$0xf]
        %v550 = vld [vmem:[%s3 + $0xc] sm:$0xf]
        %v551 = vld [vmem:[%s3 + $0x10] sm:$0xf]
        %v552 = vld [vmem:[%s3 + $0x14] sm:$0xf]
        %v553 = vld [vmem:[%s3 + $0x18] sm:$0xf]
        %v554 = vld [vmem:[%s3 + $0x1c] sm:$0xf]
        %v555 = vld [vmem:[%s3 + $0x20] sm:$0xf]
        %v556 = vld [vmem:[%s3 + $0x24] sm:$0xf]
        %v557 = vld [vmem:[%s3 + $0x28] sm:$0xf]
        %v558 = vld [vmem:[%s3 + $0x2c] sm:$0xf]
        %v559 = vld [vmem:[%s3 + $0x30] sm:$0xf]
        %v560 = vld [vmem:[%s3 + $0x34] sm:$0xf]
        %v561 = vld [vmem:[%s3 + $0x38] sm:$0xf]
        %v562 = vld [vmem:[%s3 + $0x3c] sm:$0xf]
        %v563 = vld [vmem:[%s4] sm:$0x1]
        %v565 = vlaneseq
        %v566 = vshrl.u32 %v565, 7
        %v567 = vsub.s32 0, %v566
        %v568 = vrot.slane %v563, %v567
        %v586 = vunpack.c.l.b16 %v547
        %v587 = vunpack.c.l.b16 %v548
        %v588 = vunpack.c.l.b16 %v549
        %v589 = vunpack.c.l.b16 %v550
        %v590 = vunpack.c.l.b16 %v551
        %v591 = vunpack.c.l.b16 %v552
        %v592 = vunpack.c.l.b16 %v553
        %v593 = vunpack.c.l.b16 %v554
        %v594 = vunpack.c.l.b16 %v555
        %v595 = vunpack.c.l.b16 %v556
        %v596 = vunpack.c.l.b16 %v557
        %v597 = vunpack.c.l.b16 %v558
        %v598 = vunpack.c.l.b16 %v559
        %v599 = vunpack.c.l.b16 %v560
        %v600 = vunpack.c.l.b16 %v561
        %v601 = vunpack.c.l.b16 %v562
        %v602 = vpack.c.b16 %v587, %v586
        %v603 = vpack.c.b16 %v589, %v588
        %v604 = vpack.c.b16 %v591, %v590
        %v605 = vpack.c.b16 %v593, %v592
        %v606 = vpack.c.b16 %v595, %v594
        %v607 = vpack.c.b16 %v597, %v596
        %v608 = vpack.c.b16 %v599, %v598
        %v609 = vpack.c.b16 %v601, %v600
        %618 = vmatprep.subr.bf16.mxu0 0
        %619 = vmatpush1.bf16.msra.mxu0 %v609
        %620 = vmatprep.subr.bf16.mxu0 0
        %621 = vmatpush1.bf16.msra.mxu0 %v608
        %622 = vmatprep.subr.bf16.mxu0 0
        %623 = vmatpush1.bf16.msra.mxu0 %v607
        %624 = vmatprep.subr.bf16.mxu0 0
        %625 = vmatpush1.bf16.msra.mxu0 %v606
        %626 = vmatprep.subr.bf16.mxu0 0
        %627 = vmatpush1.bf16.msra.mxu0 %v605
        %628 = vmatprep.subr.bf16.mxu0 0
        %629 = vmatpush1.bf16.msra.mxu0 %v604
        %630 = vmatprep.subr.bf16.mxu0 0
        %631 = vmatpush1.bf16.msra.mxu0 %v603
        %632 = vmatprep.subr.bf16.mxu0 0
        %633 = vmatpush1.bf16.msra.mxu0 %v602
        %634 = vmatprep.subr.bf16.mxu0 0
        %635 = vmatpush2.bf16.msra.mxu0 0
        %636 = vmatprep.subr.bf16.mxu0 0
        %637 = vmatpush2.bf16.msra.mxu0 0
        %638 = vmatprep.subr.bf16.mxu0 0
        %639 = vmatpush2.bf16.msra.mxu0 0
        %640 = vmatprep.subr.bf16.mxu0 0
        %641 = vmatpush2.bf16.msra.mxu0 0
        %642 = vmatprep.subr.bf16.mxu0 0
        %643 = vmatpush2.bf16.msra.mxu0 0
        %644 = vmatprep.subr.bf16.mxu0 0
        %645 = vmatpush2.bf16.msra.mxu0 0
        %646 = vmatprep.subr.bf16.mxu0 0
        %647 = vmatpush2.bf16.msra.mxu0 0
        %648 = vmatprep.subr.bf16.mxu0 0
        %649 = vmatpush2.bf16.msra.mxu0 0
        %650 = vmatprep.mubr.bf16.mxu0 0
        %651 = vmatmul.mubr.bf16.gmra.mxu0 %v540
        %v652 = vpop.f32.mrf.mxu0
        %v653 = vadd.f32 %v568, %v652
        %v654 = vpop.f32.mrf.mxu0
        %v655 = vpop.f32.mrf.mxu0
        %v656 = vadd.f32 %v568, %v655
        %v657 = vpop.f32.mrf.mxu0
        %658 = vmatprep.mubr.bf16.mxu0 0
        %659 = vmatmul.mubr.bf16.gmra.mxu0 %v541
        %v660 = vpop.f32.mrf.mxu0
        %v661 = vadd.f32 %v568, %v660
        %v662 = vpop.f32.mrf.mxu0
        %v663 = vpop.f32.mrf.mxu0
        %v664 = vadd.f32 %v568, %v663
        %v665 = vpop.f32.mrf.mxu0
        %666 = vmatprep.mubr.bf16.mxu0 0
        %667 = vmatmul.mubr.bf16.gmra.mxu0 %v542
        %v668 = vpop.f32.mrf.mxu0
        %v669 = vadd.f32 %v568, %v668
        %v670 = vpop.f32.mrf.mxu0
        %v671 = vpop.f32.mrf.mxu0
        %v672 = vadd.f32 %v568, %v671
        %v673 = vpop.f32.mrf.mxu0
        %674 = vmatprep.mubr.bf16.mxu0 0
        %675 = vmatmul.mubr.bf16.gmra.mxu0 %v543
        %v676 = vpop.f32.mrf.mxu0
        %v677 = vadd.f32 %v568, %v676
        %v678 = vpop.f32.mrf.mxu0
        %v679 = vpop.f32.mrf.mxu0
        %v680 = vadd.f32 %v568, %v679
        %v681 = vpop.f32.mrf.mxu0
        %682 = vmatprep.mubr.bf16.mxu0 0
        %683 = vmatmul.mubr.bf16.gmra.mxu0 %v544
        %v684 = vpop.f32.mrf.mxu0
        %v685 = vadd.f32 %v568, %v684
        %v686 = vpop.f32.mrf.mxu0
        %v687 = vpop.f32.mrf.mxu0
        %v688 = vadd.f32 %v568, %v687
        %v689 = vpop.f32.mrf.mxu0
        %690 = vmatprep.mubr.bf16.mxu0 0
        %691 = vmatmul.mubr.bf16.gmra.mxu0 %v545
        %v692 = vpop.f32.mrf.mxu0
        %v693 = vadd.f32 %v568, %v692
        %v694 = vpop.f32.mrf.mxu0
        %v695 = vpop.f32.mrf.mxu0
        %v696 = vadd.f32 %v568, %v695
        %v697 = vpop.f32.mrf.mxu0
        %698 = vmatprep.mubr.bf16.mxu0 0
        %699 = vmatmul.mubr.bf16.gmra.mxu0 %v546
        %v700 = vpop.f32.mrf.mxu0
        %v701 = vadd.f32 %v568, %v700
        %v702 = vpop.f32.mrf.mxu0
        %v703 = vpop.f32.mrf.mxu0
        %v704 = vadd.f32 %v568, %v703
        %v705 = vpop.f32.mrf.mxu0
        %706 = vdwg.mxu0
        %v707 = vsub.f32 0.0, %v653
        %v708 = vsub.f32 0.0, %v656
        %v709 = vsub.f32 0.0, %v661
        %v710 = vsub.f32 0.0, %v664
        %v711 = vsub.f32 0.0, %v669
        %v712 = vsub.f32 0.0, %v672
        %v713 = vsub.f32 0.0, %v677
        %v714 = vsub.f32 0.0, %v680
        %v715 = vsub.f32 0.0, %v685
        %v716 = vsub.f32 0.0, %v688
        %v717 = vsub.f32 0.0, %v693
        %v718 = vsub.f32 0.0, %v696
        %v719 = vsub.f32 0.0, %v701
        %v720 = vsub.f32 0.0, %v704
        %v721 = vmul.f32 %v707, 1.442695
        %v722 = vpow.pop %v721
        %v723 = vmul.f32 %v708, 1.442695
        %v724 = vpow.pop %v723
        %v725 = vmul.f32 %v709, 1.442695
        %v726 = vpow.pop %v725
        %v727 = vmul.f32 %v710, 1.442695
        %v728 = vpow.pop %v727
        %v729 = vmul.f32 %v711, 1.442695
        %v730 = vpow.pop %v729
        %v731 = vmul.f32 %v712, 1.442695
        %v732 = vpow.pop %v731
        %v733 = vmul.f32 %v713, 1.442695
        %v734 = vpow.pop %v733
        %v735 = vmul.f32 %v714, 1.442695
        %v736 = vpow.pop %v735
        %v737 = vmul.f32 %v715, 1.442695
        %v738 = vpow.pop %v737
        %v739 = vmul.f32 %v716, 1.442695
        %v740 = vpow.pop %v739
        %v741 = vmul.f32 %v717, 1.442695
        %v742 = vpow.pop %v741
        %v743 = vmul.f32 %v718, 1.442695
        %v744 = vpow.pop %v743
        %v745 = vmul.f32 %v719, 1.442695
        %v746 = vpow.pop %v745
        %v747 = vmul.f32 %v720, 1.442695
        %v748 = vpow.pop %v747
        %v749 = vadd.f32 %v722, 1.0
        %v750 = vadd.f32 %v724, 1.0
        %v751 = vadd.f32 %v726, 1.0
        %v752 = vadd.f32 %v728, 1.0
        %v753 = vadd.f32 %v730, 1.0
        %v754 = vadd.f32 %v732, 1.0
        %v755 = vadd.f32 %v734, 1.0
        %v756 = vadd.f32 %v736, 1.0
        %v757 = vadd.f32 %v738, 1.0
        %v758 = vadd.f32 %v740, 1.0
        %v759 = vadd.f32 %v742, 1.0
        %v760 = vadd.f32 %v744, 1.0
        %v761 = vadd.f32 %v746, 1.0
        %v762 = vadd.f32 %v748, 1.0
        %v763 = vrcp.pop %v749
        %v764 = vrcp.pop %v750
        %v765 = vrcp.pop %v751
        %v766 = vrcp.pop %v752
        %v767 = vrcp.pop %v753
        %v768 = vrcp.pop %v754
        %v769 = vrcp.pop %v755
        %v770 = vrcp.pop %v756
        %v771 = vrcp.pop %v757
        %v772 = vrcp.pop %v758
        %v773 = vrcp.pop %v759
        %v774 = vrcp.pop %v760
        %v775 = vrcp.pop %v761
        %v776 = vrcp.pop %v762
        %v777 = vmul.f32 %v653, %v763
        %v778 = vmul.f32 %v656, %v764
        %v779 = vmul.f32 %v661, %v765
        %v780 = vmul.f32 %v664, %v766
        %v781 = vmul.f32 %v669, %v767
        %v782 = vmul.f32 %v672, %v768
        %v783 = vmul.f32 %v677, %v769
        %v784 = vmul.f32 %v680, %v770
        %v785 = vmul.f32 %v685, %v771
        %v786 = vmul.f32 %v688, %v772
        %v787 = vmul.f32 %v693, %v773
        %v788 = vmul.f32 %v696, %v774
        %v789 = vmul.f32 %v701, %v775
        %v790 = vmul.f32 %v704, %v776
        %v791 = vpack.c.bf16 %v778, %v777
        %v792 = vpack.c.bf16 %v780, %v779
        %v793 = vpack.c.bf16 %v782, %v781
        %v794 = vpack.c.bf16 %v784, %v783
        %v795 = vpack.c.bf16 %v786, %v785
        %v796 = vpack.c.bf16 %v788, %v787
        %v797 = vpack.c.bf16 %v790, %v789
        %v798 = vld [vmem:[%s5] sm:$0xf]
        %v799 = vld [vmem:[%s5 + $0x4] sm:$0xf]
        %v800 = vld [vmem:[%s5 + $0x8] sm:$0xf]
        %v801 = vld [vmem:[%s5 + $0xc] sm:$0xf]
        %v802 = vld [vmem:[%s5 + $0x10] sm:$0xf]
        %v803 = vld [vmem:[%s5 + $0x14] sm:$0xf]
        %v804 = vld [vmem:[%s5 + $0x18] sm:$0xf]
        %v805 = vld [vmem:[%s5 + $0x1c] sm:$0xf]
        %v806 = vld [vmem:[%s5 + $0x20] sm:$0xf]
        %v807 = vld [vmem:[%s5 + $0x24] sm:$0xf]
        %v808 = vld [vmem:[%s5 + $0x28] sm:$0xf]
        %v809 = vld [vmem:[%s5 + $0x2c] sm:$0xf]
        %v810 = vld [vmem:[%s5 + $0x30] sm:$0xf]
        %v811 = vld [vmem:[%s5 + $0x34] sm:$0xf]
        %v812 = vld [vmem:[%s5 + $0x38] sm:$0xf]
        %v813 = vld [vmem:[%s5 + $0x3c] sm:$0xf]
        %v814 = vld [vmem:[%s6] sm:$0x1]
        %v816 = vlaneseq
        %v817 = vshrl.u32 %v816, 7
        %v818 = vsub.s32 0, %v817
        %v819 = vrot.slane %v814, %v818
        %v837 = vunpack.c.l.b16 %v798
        %v838 = vunpack.c.l.b16 %v799
        %v839 = vunpack.c.l.b16 %v800
        %v840 = vunpack.c.l.b16 %v801
        %v841 = vunpack.c.l.b16 %v802
        %v842 = vunpack.c.l.b16 %v803
        %v843 = vunpack.c.l.b16 %v804
        %v844 = vunpack.c.l.b16 %v805
        %v845 = vunpack.c.l.b16 %v806
        %v846 = vunpack.c.l.b16 %v807
        %v847 = vunpack.c.l.b16 %v808
        %v848 = vunpack.c.l.b16 %v809
        %v849 = vunpack.c.l.b16 %v810
        %v850 = vunpack.c.l.b16 %v811
        %v851 = vunpack.c.l.b16 %v812
        %v852 = vunpack.c.l.b16 %v813
        %v853 = vpack.c.b16 %v838, %v837
        %v854 = vpack.c.b16 %v840, %v839
        %v855 = vpack.c.b16 %v842, %v841
        %v856 = vpack.c.b16 %v844, %v843
        %v857 = vpack.c.b16 %v846, %v845
        %v858 = vpack.c.b16 %v848, %v847
        %v859 = vpack.c.b16 %v850, %v849
        %v860 = vpack.c.b16 %v852, %v851
        %869 = vmatprep.subr.bf16.mxu0 0
        %870 = vmatpush1.bf16.msra.mxu0 %v860
        %871 = vmatprep.subr.bf16.mxu0 0
        %872 = vmatpush1.bf16.msra.mxu0 %v859
        %873 = vmatprep.subr.bf16.mxu0 0
        %874 = vmatpush1.bf16.msra.mxu0 %v858
        %875 = vmatprep.subr.bf16.mxu0 0
        %876 = vmatpush1.bf16.msra.mxu0 %v857
        %877 = vmatprep.subr.bf16.mxu0 0
        %878 = vmatpush1.bf16.msra.mxu0 %v856
        %879 = vmatprep.subr.bf16.mxu0 0
        %880 = vmatpush1.bf16.msra.mxu0 %v855
        %881 = vmatprep.subr.bf16.mxu0 0
        %882 = vmatpush1.bf16.msra.mxu0 %v854
        %883 = vmatprep.subr.bf16.mxu0 0
        %884 = vmatpush1.bf16.msra.mxu0 %v853
        %885 = vmatprep.subr.bf16.mxu0 0
        %886 = vmatpush2.bf16.msra.mxu0 0
        %887 = vmatprep.subr.bf16.mxu0 0
        %888 = vmatpush2.bf16.msra.mxu0 0
        %889 = vmatprep.subr.bf16.mxu0 0
        %890 = vmatpush2.bf16.msra.mxu0 0
        %891 = vmatprep.subr.bf16.mxu0 0
        %892 = vmatpush2.bf16.msra.mxu0 0
        %893 = vmatprep.subr.bf16.mxu0 0
        %894 = vmatpush2.bf16.msra.mxu0 0
        %895 = vmatprep.subr.bf16.mxu0 0
        %896 = vmatpush2.bf16.msra.mxu0 0
        %897 = vmatprep.subr.bf16.mxu0 0
        %898 = vmatpush2.bf16.msra.mxu0 0
        %899 = vmatprep.subr.bf16.mxu0 0
        %900 = vmatpush2.bf16.msra.mxu0 0
        %901 = vmatprep.mubr.bf16.mxu0 0
        %902 = vmatmul.mubr.bf16.gmra.mxu0 %v791
        %v903 = vpop.f32.mrf.mxu0
        %v904 = vadd.f32 %v819, %v903
        %v905 = vpop.f32.mrf.mxu0
        %v906 = vpop.f32.mrf.mxu0
        %v907 = vadd.f32 %v819, %v906
        %v908 = vpop.f32.mrf.mxu0
        %909 = vmatprep.mubr.bf16.mxu0 0
        %910 = vmatmul.mubr.bf16.gmra.mxu0 %v792
        %v911 = vpop.f32.mrf.mxu0
        %v912 = vadd.f32 %v819, %v911
        %v913 = vpop.f32.mrf.mxu0
        %v914 = vpop.f32.mrf.mxu0
        %v915 = vadd.f32 %v819, %v914
        %v916 = vpop.f32.mrf.mxu0
        %917 = vmatprep.mubr.bf16.mxu0 0
        %918 = vmatmul.mubr.bf16.gmra.mxu0 %v793
        %v919 = vpop.f32.mrf.mxu0
        %v920 = vadd.f32 %v819, %v919
        %v921 = vpop.f32.mrf.mxu0
        %v922 = vpop.f32.mrf.mxu0
        %v923 = vadd.f32 %v819, %v922
        %v924 = vpop.f32.mrf.mxu0
        %925 = vmatprep.mubr.bf16.mxu0 0
        %926 = vmatmul.mubr.bf16.gmra.mxu0 %v794
        %v927 = vpop.f32.mrf.mxu0
        %v928 = vadd.f32 %v819, %v927
        %v929 = vpop.f32.mrf.mxu0
        %v930 = vpop.f32.mrf.mxu0
        %v931 = vadd.f32 %v819, %v930
        %v932 = vpop.f32.mrf.mxu0
        %933 = vmatprep.mubr.bf16.mxu0 0
        %934 = vmatmul.mubr.bf16.gmra.mxu0 %v795
        %v935 = vpop.f32.mrf.mxu0
        %v936 = vadd.f32 %v819, %v935
        %v937 = vpop.f32.mrf.mxu0
        %v938 = vpop.f32.mrf.mxu0
        %v939 = vadd.f32 %v819, %v938
        %v940 = vpop.f32.mrf.mxu0
        %941 = vmatprep.mubr.bf16.mxu0 0
        %942 = vmatmul.mubr.bf16.gmra.mxu0 %v796
        %v943 = vpop.f32.mrf.mxu0
        %v944 = vadd.f32 %v819, %v943
        %v945 = vpop.f32.mrf.mxu0
        %v946 = vpop.f32.mrf.mxu0
        %v947 = vadd.f32 %v819, %v946
        %v948 = vpop.f32.mrf.mxu0
        %949 = vmatprep.mubr.bf16.mxu0 0
        %950 = vmatmul.mubr.bf16.gmra.mxu0 %v797
        %v951 = vpop.f32.mrf.mxu0
        %v952 = vadd.f32 %v819, %v951
        %v953 = vpop.f32.mrf.mxu0
        %v954 = vpop.f32.mrf.mxu0
        %v955 = vadd.f32 %v819, %v954
        %v956 = vpop.f32.mrf.mxu0
        %957 = vdwg.mxu0
        %v958 = vpack.c.bf16 %v907, %v904
        %v959 = vpack.c.bf16 %v915, %v912
        %v960 = vpack.c.bf16 %v923, %v920
        %v961 = vpack.c.bf16 %v931, %v928
        %v962 = vpack.c.bf16 %v939, %v936
        %v963 = vpack.c.bf16 %v947, %v944
        %v964 = vpack.c.bf16 %v955, %v952
        %v972 = vunpack.c.l.b16 %v958
        %v973 = vunpack.c.h.b16 %v958
        %v974 = vunpack.c.l.b16 %v959
        %v975 = vunpack.c.h.b16 %v959
        %v976 = vunpack.c.l.b16 %v960
        %v977 = vunpack.c.h.b16 %v960
        %v978 = vunpack.c.l.b16 %v961
        %v979 = vunpack.c.h.b16 %v961
        %v980 = vunpack.c.l.b16 %v962
        %v981 = vunpack.c.h.b16 %v962
        %v982 = vunpack.c.l.b16 %v963
        %v983 = vunpack.c.h.b16 %v963
        %v984 = vunpack.c.l.b16 %v964
        %v985 = vunpack.c.h.b16 %v964
        %v986 = vpack.c.b16 %v972, %v972
        %v987 = vpack.c.b16 %v973, %v973
        %v988 = vpack.c.b16 %v974, %v974
        %v989 = vpack.c.b16 %v975, %v975
        %v990 = vpack.c.b16 %v976, %v976
        %v991 = vpack.c.b16 %v977, %v977
        %v992 = vpack.c.b16 %v978, %v978
        %v993 = vpack.c.b16 %v979, %v979
        %v994 = vpack.c.b16 %v980, %v980
        %v995 = vpack.c.b16 %v981, %v981
        %v996 = vpack.c.b16 %v982, %v982
        %v997 = vpack.c.b16 %v983, %v983
        %v998 = vpack.c.b16 %v984, %v984
        %v999 = vpack.c.b16 %v985, %v985
        %1014 = vst [vmem:[%s280] sm:$0xf] %v986
        %1015 = vst [vmem:[%s280 + $0x4] sm:$0xf] %v987
        %1016 = vst [vmem:[%s280 + $0x8] sm:$0xf] %v988
        %1017 = vst [vmem:[%s280 + $0xc] sm:$0xf] %v989
        %1018 = vst [vmem:[%s280 + $0x10] sm:$0xf] %v990
        %1019 = vst [vmem:[%s280 + $0x14] sm:$0xf] %v991
        %1020 = vst [vmem:[%s280 + $0x18] sm:$0xf] %v992
        %1021 = vst [vmem:[%s280 + $0x1c] sm:$0xf] %v993
        %1022 = vst [vmem:[%s280 + $0x20] sm:$0xf] %v994
        %1023 = vst [vmem:[%s280 + $0x24] sm:$0xf] %v995
        %1024 = vst [vmem:[%s280 + $0x28] sm:$0xf] %v996
        %1025 = vst [vmem:[%s280 + $0x2c] sm:$0xf] %v997
        %1026 = vst [vmem:[%s280 + $0x30] sm:$0xf] %v998
        %1027 = vst [vmem:[%s280 + $0x34] sm:$0xf] %v999
        %s1028 = sand.u32 %s178, 1
        %s1029 = sand.u32 %s178, 1
        %s1030 = smul.addr %s1029, 56
        %s1031 = scalar_lea.vmem [#allocation2], %s1030
        // Predicated region
        $region49: #{classifier_forward.1} parent=47 // pred_check
          %p1032 = pneg %p188
        $region50: #{classifier_forward.1} parent=47 // pred_check_branch
          %1034 = sbr.rel (%p1032) target = $region52
        $region51: #{classifier_forward.1} parent=47 // pred_region
          %s1035 = smul.u32 14, %s18
          %s1036 = ssub.s32 25, %s1035
          %p1037 = scmp.lt.s32.totalorder %s1036, 14
          %s1038 = scalar_select %p1037, %s1036, 14
          %s1039 = smul.u32 64, %s1038
          %p1040 = scmp.ne.s32.totalorder 0, %s1039
          %s1041 = smul.addr %s1035, 4
          %s1042 = scalar_lea.vmem %s7, %s1041
          // Predicated region
          $region53: #{classifier_forward.1} parent=51 // pred_check
            %p1043 = pneg %p1040
          $region54: #{classifier_forward.1} parent=51 // pred_check_branch
            %1045 = sbr.rel (%p1043) target = $region56
          $region55: #{classifier_forward.1} parent=51 // pred_region
            // Predicated region
            $region57: #{classifier_forward.1} parent=55 // pred_check
              _
            $region58: #{classifier_forward.1} parent=55 // pred_check_branch
              %1047 = sbr.rel target = $region60
            $region59: #{classifier_forward.1} parent=55 // pred_region
              // Predicated region
              $region79: #{classifier_forward.1} parent=59 // pred_check
                _
              $region80: #{classifier_forward.1} parent=59 // pred_check_branch
                %1124 = sbr.rel (0) target = $region82
              $region81: #{classifier_forward.1} parent=59 // pred_region
                %s1126 = ssub.s32 16, 1
                %s1127 = sdiv.u32.pop %s1038, 14
                %s1128 = srem.u32.pop %s1038, 14
                // While loop
                $region83: #{classifier_forward.1} parent=81 // loop_pre_header
                  _
                $region84: #{classifier_forward.1} parent=81 // loop_header
                  %s1130 = sphi 0, %s1132
                  %p1131 = scmp.ge.s32.totalorder %s1130, %s1127
                  %s1135 = sphi 0, %s1168
                  %s1136 = sphi %s1031, %s1171
                  %s1137 = sphi %s1042, %s1172
                $region85: #{classifier_forward.1} parent=81 // loop_header_branch
                  %1134 = sbr.rel (%p1131) target = $region89
                $region86: #{classifier_forward.1} parent=81 // loop_body
                  %v1138 = vld [vmem:[%s1136] sm:%s1126]
                  %1139 = vst [vmem:[%s1137] sm:%s1126] %v1138
                  %v1140 = vld [vmem:[%s1136 + $0x4] sm:%s1126]
                  %1141 = vst [vmem:[%s1137 + $0x4] sm:%s1126] %v1140
                  %v1142 = vld [vmem:[%s1136 + $0x8] sm:%s1126]
                  %1143 = vst [vmem:[%s1137 + $0x8] sm:%s1126] %v1142
                  %v1144 = vld [vmem:[%s1136 + $0xc] sm:%s1126]
                  %1145 = vst [vmem:[%s1137 + $0xc] sm:%s1126] %v1144
                  %v1146 = vld [vmem:[%s1136 + $0x10] sm:%s1126]
                  %1147 = vst [vmem:[%s1137 + $0x10] sm:%s1126] %v1146
                  %v1148 = vld [vmem:[%s1136 + $0x14] sm:%s1126]
                  %1149 = vst [vmem:[%s1137 + $0x14] sm:%s1126] %v1148
                  %v1150 = vld [vmem:[%s1136 + $0x18] sm:%s1126]
                  %1151 = vst [vmem:[%s1137 + $0x18] sm:%s1126] %v1150
                  %v1152 = vld [vmem:[%s1136 + $0x1c] sm:%s1126]
                  %1153 = vst [vmem:[%s1137 + $0x1c] sm:%s1126] %v1152
                  %v1154 = vld [vmem:[%s1136 + $0x20] sm:%s1126]
                  %1155 = vst [vmem:[%s1137 + $0x20] sm:%s1126] %v1154
                  %v1156 = vld [vmem:[%s1136 + $0x24] sm:%s1126]
                  %1157 = vst [vmem:[%s1137 + $0x24] sm:%s1126] %v1156
                  %v1158 = vld [vmem:[%s1136 + $0x28] sm:%s1126]
                  %1159 = vst [vmem:[%s1137 + $0x28] sm:%s1126] %v1158
                  %v1160 = vld [vmem:[%s1136 + $0x2c] sm:%s1126]
                  %1161 = vst [vmem:[%s1137 + $0x2c] sm:%s1126] %v1160
                  %v1162 = vld [vmem:[%s1136 + $0x30] sm:%s1126]
                  %1163 = vst [vmem:[%s1137 + $0x30] sm:%s1126] %v1162
                  %v1164 = vld [vmem:[%s1136 + $0x34] sm:%s1126]
                  %1165 = vst [vmem:[%s1137 + $0x34] sm:%s1126] %v1164
                  %s1166 = sadd.s32 1, %s1135
                  %p1167 = scmp.ge.s32.totalorder %s1166, %s1127
                  %s1168 = scalar_select %p1167, 0, %s1166
                  %s1169 = smul.u32 %s1168, 56
                  %s1170 = smul.u32 %s1168, 56
                  %s1171 = scalar_lea.vmem %s1031, %s1169 [#allocation2]
                  %s1172 = scalar_lea.vmem %s1042, %s1170
                $region87: #{classifier_forward.1} parent=81 // loop_footer
                  %s1132 = sadd.s32 %s1130, 1
                $region88: #{classifier_forward.1} parent=81 // loop_footer_branch
                  %1129 = sbr.rel target = $region84
                $region89: #{classifier_forward.1} parent=81 // loop_exit
                  _
                %s1173 = sdiv.u32.pop %s1038, 14
                %s1174 = srem.u32.pop %s1038, 14
                %s1175 = smul.u32 %s1173, 14
                %s1176 = smul.u32 4, %s1175
                %s1177 = scalar_lea.vmem %s1031, %s1176 [#allocation2]
                %s1178 = smul.u32 4, %s1175
                %s1179 = scalar_lea.vmem %s1042, %s1178
                // While loop
                $region90: #{classifier_forward.1} parent=81 // loop_pre_header
                  _
                $region91: #{classifier_forward.1} parent=81 // loop_header
                  %s1181 = sphi 0, %s1183
                  %p1182 = scmp.ge.s32.totalorder %s1181, %s1174
                  %s1186 = sphi 0, %s1193
                  %s1187 = sphi %s1177, %s1196
                  %s1188 = sphi %s1179, %s1197
                $region92: #{classifier_forward.1} parent=81 // loop_header_branch
                  %1185 = sbr.rel (%p1182) target = $region96
                $region93: #{classifier_forward.1} parent=81 // loop_body
                  %v1189 = vld [vmem:[%s1187] sm:%s1126]
                  %1190 = vst [vmem:[%s1188] sm:%s1126] %v1189
                  %s1191 = sadd.s32 1, %s1186
                  %p1192 = scmp.ge.s32.totalorder %s1191, %s1174
                  %s1193 = scalar_select %p1192, 0, %s1191
                  %s1194 = smul.u32 %s1193, 4
                  %s1195 = smul.u32 %s1193, 4
                  %s1196 = scalar_lea.vmem %s1177, %s1194 [#allocation2]
                  %s1197 = scalar_lea.vmem %s1179, %s1195
                $region94: #{classifier_forward.1} parent=81 // loop_footer
                  %s1183 = sadd.s32 %s1181, 1
                $region95: #{classifier_forward.1} parent=81 // loop_footer_branch
                  %1180 = sbr.rel target = $region91
                $region96: #{classifier_forward.1} parent=81 // loop_exit
                  _
              $region82: #{classifier_forward.1} parent=59 // pred_fallthru
                _
            $region60: #{classifier_forward.1} parent=55 // pred_fallthru
              _
            // Predicated region
            $region61: #{classifier_forward.1} parent=55 // pred_check
              _
            $region62: #{classifier_forward.1} parent=55 // pred_check_branch
              %1049 = sbr.rel (0) target = $region64
            $region63: #{classifier_forward.1} parent=55 // pred_region
              %s1051 = ssub.s32 16, 1
              %s1052 = sdiv.u32.pop %s1038, 14
              %s1053 = srem.u32.pop %s1038, 14
              // While loop
              $region65: #{classifier_forward.1} parent=63 // loop_pre_header
                _
              $region66: #{classifier_forward.1} parent=63 // loop_header
                %s1055 = sphi 0, %s1057
                %p1056 = scmp.ge.s32.totalorder %s1055, %s1052
                %s1060 = sphi 0, %s1093
                %s1061 = sphi %s1031, %s1096
                %s1062 = sphi %s1042, %s1097
              $region67: #{classifier_forward.1} parent=63 // loop_header_branch
                %1059 = sbr.rel (%p1056) target = $region71
              $region68: #{classifier_forward.1} parent=63 // loop_body
                %v1063 = vld [vmem:[%s1061] sm:%s1051]
                %1064 = vst [vmem:[%s1062] sm:%s1051] %v1063
                %v1065 = vld [vmem:[%s1061 + $0x4] sm:%s1051]
                %1066 = vst [vmem:[%s1062 + $0x4] sm:%s1051] %v1065
                %v1067 = vld [vmem:[%s1061 + $0x8] sm:%s1051]
                %1068 = vst [vmem:[%s1062 + $0x8] sm:%s1051] %v1067
                %v1069 = vld [vmem:[%s1061 + $0xc] sm:%s1051]
                %1070 = vst [vmem:[%s1062 + $0xc] sm:%s1051] %v1069
                %v1071 = vld [vmem:[%s1061 + $0x10] sm:%s1051]
                %1072 = vst [vmem:[%s1062 + $0x10] sm:%s1051] %v1071
                %v1073 = vld [vmem:[%s1061 + $0x14] sm:%s1051]
                %1074 = vst [vmem:[%s1062 + $0x14] sm:%s1051] %v1073
                %v1075 = vld [vmem:[%s1061 + $0x18] sm:%s1051]
                %1076 = vst [vmem:[%s1062 + $0x18] sm:%s1051] %v1075
                %v1077 = vld [vmem:[%s1061 + $0x1c] sm:%s1051]
                %1078 = vst [vmem:[%s1062 + $0x1c] sm:%s1051] %v1077
                %v1079 = vld [vmem:[%s1061 + $0x20] sm:%s1051]
                %1080 = vst [vmem:[%s1062 + $0x20] sm:%s1051] %v1079
                %v1081 = vld [vmem:[%s1061 + $0x24] sm:%s1051]
                %1082 = vst [vmem:[%s1062 + $0x24] sm:%s1051] %v1081
                %v1083 = vld [vmem:[%s1061 + $0x28] sm:%s1051]
                %1084 = vst [vmem:[%s1062 + $0x28] sm:%s1051] %v1083
                %v1085 = vld [vmem:[%s1061 + $0x2c] sm:%s1051]
                %1086 = vst [vmem:[%s1062 + $0x2c] sm:%s1051] %v1085
                %v1087 = vld [vmem:[%s1061 + $0x30] sm:%s1051]
                %1088 = vst [vmem:[%s1062 + $0x30] sm:%s1051] %v1087
                %v1089 = vld [vmem:[%s1061 + $0x34] sm:%s1051]
                %1090 = vst [vmem:[%s1062 + $0x34] sm:%s1051] %v1089
                %s1091 = sadd.s32 1, %s1060
                %p1092 = scmp.ge.s32.totalorder %s1091, %s1052
                %s1093 = scalar_select %p1092, 0, %s1091
                %s1094 = smul.u32 %s1093, 56
                %s1095 = smul.u32 %s1093, 56
                %s1096 = scalar_lea.vmem %s1031, %s1094 [#allocation2]
                %s1097 = scalar_lea.vmem %s1042, %s1095
              $region69: #{classifier_forward.1} parent=63 // loop_footer
                %s1057 = sadd.s32 %s1055, 1
              $region70: #{classifier_forward.1} parent=63 // loop_footer_branch
                %1054 = sbr.rel target = $region66
              $region71: #{classifier_forward.1} parent=63 // loop_exit
                _
              %s1098 = sdiv.u32.pop %s1038, 14
              %s1099 = srem.u32.pop %s1038, 14
              %s1100 = smul.u32 %s1098, 14
              %s1101 = smul.u32 4, %s1100
              %s1102 = scalar_lea.vmem %s1031, %s1101 [#allocation2]
              %s1103 = smul.u32 4, %s1100
              %s1104 = scalar_lea.vmem %s1042, %s1103
              // While loop
              $region72: #{classifier_forward.1} parent=63 // loop_pre_header
                _
              $region73: #{classifier_forward.1} parent=63 // loop_header
                %s1106 = sphi 0, %s1108
                %p1107 = scmp.ge.s32.totalorder %s1106, %s1099
                %s1111 = sphi 0, %s1118
                %s1112 = sphi %s1102, %s1121
                %s1113 = sphi %s1104, %s1122
              $region74: #{classifier_forward.1} parent=63 // loop_header_branch
                %1110 = sbr.rel (%p1107) target = $region78
              $region75: #{classifier_forward.1} parent=63 // loop_body
                %v1114 = vld [vmem:[%s1112] sm:%s1051]
                %1115 = vst [vmem:[%s1113] sm:%s1051] %v1114
                %s1116 = sadd.s32 1, %s1111
                %p1117 = scmp.ge.s32.totalorder %s1116, %s1099
                %s1118 = scalar_select %p1117, 0, %s1116
                %s1119 = smul.u32 %s1118, 4
                %s1120 = smul.u32 %s1118, 4
                %s1121 = scalar_lea.vmem %s1102, %s1119 [#allocation2]
                %s1122 = scalar_lea.vmem %s1104, %s1120
              $region76: #{classifier_forward.1} parent=63 // loop_footer
                %s1108 = sadd.s32 %s1106, 1
              $region77: #{classifier_forward.1} parent=63 // loop_footer_branch
                %1105 = sbr.rel target = $region73
              $region78: #{classifier_forward.1} parent=63 // loop_exit
                _
            $region64: #{classifier_forward.1} parent=55 // pred_fallthru
              _
          $region56: #{classifier_forward.1} parent=51 // pred_fallthru
            _
          %1198 = vnop
        $region52: #{classifier_forward.1} parent=47 // pred_fallthru
          _
      $region48: #{classifier_forward.1} parent=5 // pred_fallthru
        _
      %p1199 = scmp.le.s32.totalorder 2, %s13
      // Predicated region
      $region97: #{classifier_forward.1} parent=5 // pred_check
        %p1200 = pneg %p1199
      $region98: #{classifier_forward.1} parent=5 // pred_check_branch
        %1202 = sbr.rel (%p1200) target = $region100
      $region99: #{classifier_forward.1} parent=5 // pred_region
        %s1203 = ssub.s32 %s13, 2
        // Predicated region
        $region101: #{classifier_forward.1} parent=99 // pred_check
          %p1204 = pneg %p194
        $region102: #{classifier_forward.1} parent=99 // pred_check_branch
          %1206 = sbr.rel (%p1204) target = $region104
        $region103: #{classifier_forward.1} parent=99 // pred_region
          %s1207 = sand.u32 %s179, 1
          %s1208 = sand.u32 %s179, 1
          %s1209 = smul.addr %s1208, 56
          %s1210 = scalar_lea.vmem [#allocation2], %s1209
        $region104: #{classifier_forward.1} parent=99 // pred_fallthru
          _
      $region100: #{classifier_forward.1} parent=5 // pred_fallthru
        _
    $region6: #{classifier_forward.1} parent=1 // loop_footer
      %s17 = sadd.s32 1, %s13
    $region7: #{classifier_forward.1} parent=1 // loop_footer_branch
      %12 = sbr.rel target = $region3
    $region8: #{classifier_forward.1} parent=1 // loop_exit
      _

</llo_original>
